<compile_context>
chip_gen: v7x
topology: tpu7x:2x2x1
jax: 0.10.0
libtpu: 0.0.40
codegen_flags: <defaults>
</compile_context>

<pallas_src>
import functools
import math

import jax
import jax.numpy as jnp
from jax.experimental import pallas as pl
from jax.experimental.pallas import tpu as pltpu

_TARGET_BLOCK_ELEMS = 256 * 1024  # ~1 MiB per f32 buffer per block


def _bits_to_unit_float(bits_u32):
    """uint32 random bits -> f32 in [1.0, 2.0) via the mantissa bit-trick."""
    mant = jnp.bitwise_or(jnp.right_shift(bits_u32, jnp.uint32(9)),
                          jnp.uint32(0x3F800000))
    return pltpu.bitcast(mant, jnp.float32)


def _gn_prng_kernel(seed_ref, x_ref, o_ref, *, sigma):
    """TPU path: in-kernel hardware PRNG + Box-Muller (both outputs used)."""
    # Mix the grid position into the seed so every block (and each
    # megacore TensorCore under "parallel") draws independent noise.
    pltpu.prng_seed(seed_ref[0], pl.program_id(0))

    rows, lane = x_ref.shape
    half = lane // 2

    bits1 = pltpu.bitcast(pltpu.prng_random_bits((rows, half)), jnp.uint32)
    bits2 = pltpu.bitcast(pltpu.prng_random_bits((rows, half)), jnp.uint32)

    u1 = 2.0 - _bits_to_unit_float(bits1)      # (0, 1]  -> log() is safe
    u2 = _bits_to_unit_float(bits2) - 1.0      # [0, 1)

    r = jnp.sqrt(-2.0 * jnp.log(u1))
    theta = jnp.float32(2.0 * math.pi) * u2
    # Use both Box-Muller outputs: one per lane-half of the tile.
    noise = jnp.concatenate([r * jnp.cos(theta), r * jnp.sin(theta)], axis=-1)

    x = x_ref[...].astype(jnp.float32)
    o_ref[...] = (x * (1.0 + jnp.float32(sigma) * noise)).astype(o_ref.dtype)


def _gn_noise_input_kernel(x_ref, n_ref, o_ref, *, sigma):
    """Fallback path: pre-sampled N(0,1) noise as input, fused scale+add."""
    x = x_ref[...].astype(jnp.float32)
    n = n_ref[...].astype(jnp.float32)
    o_ref[...] = (x * (1.0 + jnp.float32(sigma) * n)).astype(o_ref.dtype)


def _lane_dense_view(x):
    """Flatten x to a lane-dense (rows, lane) slab. Returns (x2d, lane, pad)."""
    total = x.size
    lane = None
    for cand in (1024, 512, 256, 128):
        if total % cand == 0:
            lane = cand
            break
    if lane is None:
        lane = 1024
    pad = (-total) % lane
    flat = x.reshape(-1)
    if pad:
        flat = jnp.concatenate([flat, jnp.zeros((pad,), dtype=x.dtype)])
    rows = (total + pad) // lane
    return flat.reshape(rows, lane), lane, pad


def _row_block(rows, lane):
    target = max(8, _TARGET_BLOCK_ELEMS // lane)
    if rows <= target:
        return rows                 # full extent: always a legal block shape
    return (target // 8) * 8        # multiple of 8 sublanes


def gaussian_noise(x, seed=0, *, sigma=0.1, training=True,
                   is_relative_detach=False):
    """Pallas implementation of GaussianNoise.forward (forward values only)."""
    del is_relative_detach  # only affects autograd; forward value is identical
    if (not training) or sigma == 0:
        return x

    orig_shape = x.shape
    total = x.size
    x2d, lane, pad = _lane_dense_view(x)
    rows = x2d.shape[0]
    block_rows = _row_block(rows, lane)
    num_blocks = pl.cdiv(rows, block_rows)

    if jax.default_backend() == "tpu":
        seed_arr = jnp.asarray([seed], dtype=jnp.int32)
        out2d = pl.pallas_call(
            functools.partial(_gn_prng_kernel, sigma=float(sigma)),
            out_shape=jax.ShapeDtypeStruct((rows, lane), x.dtype),
            grid_spec=pltpu.PrefetchScalarGridSpec(
                num_scalar_prefetch=1,   # seed -> SMEM before the grid runs
                grid=(num_blocks,),
                in_specs=[pl.BlockSpec((block_rows, lane),
                                       lambda i, seed_ref: (i, 0))],
                out_specs=pl.BlockSpec((block_rows, lane),
                                       lambda i, seed_ref: (i, 0)),
            ),
            compiler_params=pltpu.CompilerParams(
                dimension_semantics=("parallel",),
            ),
        )(seed_arr, x2d)
    else:
        # TODO(synk): pltpu.prng_seed/prng_random_bits have no CPU/interpret
        # lowering; on non-TPU backends sample N(0,1) with jax.random and fuse
        # only the scale+add in Pallas.
        noise2d = jax.random.normal(jax.random.PRNGKey(seed), x2d.shape,
                                    dtype=jnp.float32)
        out2d = pl.pallas_call(
            functools.partial(_gn_noise_input_kernel, sigma=float(sigma)),
            out_shape=jax.ShapeDtypeStruct((rows, lane), x.dtype),
            grid=(num_blocks,),
            in_specs=[pl.BlockSpec((block_rows, lane), lambda i: (i, 0)),
                      pl.BlockSpec((block_rows, lane), lambda i: (i, 0))],
            out_specs=pl.BlockSpec((block_rows, lane), lambda i: (i, 0)),
        )(x2d, noise2d)

    out = out2d.reshape(-1)
    if pad:
        out = out[:total]
    return out.reshape(orig_shape)


if __name__ == "__main__":
    key = jax.random.PRNGKey(0)
    # Small NCHW input consistent with an ESRGAN feature map.
    x = jax.random.normal(key, (2, 4, 16, 16), dtype=jnp.float32)

    out = jax.block_until_ready(gaussian_noise(x, seed=0, training=True))
    assert out.shape == x.shape and out.dtype == x.dtype
    assert bool(jnp.all(jnp.isfinite(out)))

    # Noise is multiplicative: mean relative deviation should be ~sigma-sized.
    rel = jnp.abs(out - x) / jnp.maximum(jnp.abs(x), 1e-6)
    assert float(jnp.mean(rel)) < 1.0

    # Eval-mode path is identity.
    out_eval = jax.block_until_ready(gaussian_noise(x, training=False))
    assert bool(jnp.all(out_eval == x))

    print("KERNEL_OK")
</pallas_src>

<mosaic_0001>
module attributes {stable_mosaic.version = 11 : i64} {
  func.func @_gn_noise_input_kernel(%arg0: i32, %arg1: memref<2x1024xf32, #tpu.memory_space<vmem>>, %arg2: memref<2x1024xf32, #tpu.memory_space<vmem>>, %arg3: memref<2x1024xf32, #tpu.memory_space<vmem>>) attributes {dimension_semantics = [#tpu.dimension_semantics<arbitrary>], iteration_bounds = array<i64: 1>, scalar_prefetch = 0 : i64, scratch_operands = 0 : i64, tpu.core_type = #tpu.core_type<tc>, window_params = [{transform_indices = @transform_0, window_bounds = array<i64: 2, 1024>}, {transform_indices = @transform_1, window_bounds = array<i64: 2, 1024>}, {transform_indices = @transform_2, window_bounds = array<i64: 2, 1024>}]} {
    %c0 = arith.constant 0 : index
    %c0_0 = arith.constant 0 : index
    %0 = vector.load %arg1[%c0, %c0_0] : memref<2x1024xf32, #tpu.memory_space<vmem>>, vector<2x1024xf32>
    %c0_1 = arith.constant 0 : index
    %c0_2 = arith.constant 0 : index
    %1 = vector.load %arg2[%c0_1, %c0_2] : memref<2x1024xf32, #tpu.memory_space<vmem>>, vector<2x1024xf32>
    %cst = arith.constant 1.000000e-01 : f32
    %2 = vector.broadcast %cst : f32 to vector<2x1024xf32>
    %3 = arith.mulf %2, %1 : vector<2x1024xf32>
    %cst_3 = arith.constant 1.000000e+00 : f32
    %4 = vector.broadcast %cst_3 : f32 to vector<2x1024xf32>
    %5 = arith.addf %4, %3 : vector<2x1024xf32>
    %6 = arith.mulf %0, %5 : vector<2x1024xf32>
    %c0_4 = arith.constant 0 : index
    %c0_5 = arith.constant 0 : index
    %7 = vector.load %arg3[%c0_4, %c0_5] : memref<2x1024xf32, #tpu.memory_space<vmem>>, vector<2x1024xf32>
    tpu.vector_store %arg3[%c0_4, %c0_5], %6 {strides = array<i32>} : memref<2x1024xf32, #tpu.memory_space<vmem>>, vector<2x1024xf32>,
    return
  }
  func.func @transform_0(%arg0: i32) -> (i32, i32) {
    %c0_i32 = arith.constant 0 : i32
    %c0_i32_0 = arith.constant 0 : i32
    return %arg0, %c0_i32 : i32, i32
  }
  func.func @transform_1(%arg0: i32) -> (i32, i32) {
    %c0_i32 = arith.constant 0 : i32
    %c0_i32_0 = arith.constant 0 : i32
    return %arg0, %c0_i32 : i32, i32
  }
  func.func @transform_2(%arg0: i32) -> (i32, i32) {
    %c0_i32 = arith.constant 0 : i32
    %c0_i32_0 = arith.constant 0 : i32
    return %arg0, %c0_i32 : i32, i32
  }
}

</mosaic_0001>

<llo_original>
// kernel: tpu_custom_call.1
$region0: #{tpu_custom_call.1}
  #allocation0 [shape = 'u32[]', space=smem, size = 0x4, offset = 0x4, fixed_abs, tag = 'smem constant byte address 0x4 - core index']
  #allocation1 [shape = 'u32[144,128]{1,0:T(1,128)}', space=vmem, size = 0x12000, scoped, tag = 'internal scratch']
  %s0 = inlined_call_operand.hbm [shape: f32[2,1024], index: 0, kind: input, shape index: {}]
  %s1 = inlined_call_operand.hbm [shape: f32[2,1024], index: 1, kind: input, shape index: {}]
  %s2 = inlined_call_operand.hbm [shape: f32[2,1024], index: 2, kind: output, shape index: {}]
  %s3 = sld [smem:[#allocation0]]
  $region26: #{tpu_custom_call.1} parent=0
    _
  %s5 = ssub.s32 1, %s3
  %s6 = scalar_select 0, %s5, %s3
  $region1: #{tpu_custom_call.1} parent=0
    #allocation2 [shape = 'u8[8192]{0}', space=vmem, size = 0x2000, scoped, tag = 'input window, operand 0, single buffered']
    #allocation3 [shape = 's32[1]{0}', space=sflag, size = 0x4, scoped, tag = 'scoped memory for tpu_custom_call.1']
    #allocation4 [shape = 's32[1]{0}', space=sflag, size = 0x4, scoped, tag = 'scoped memory for tpu_custom_call.1']
    #allocation5 [shape = 'u8[8192]{0}', space=vmem, size = 0x2000, scoped, tag = 'input window, operand 1, single buffered']
    #allocation6 [shape = 's32[1]{0}', space=sflag, size = 0x4, scoped, tag = 'scoped memory for tpu_custom_call.1']
    #allocation7 [shape = 'u8[8192]{0}', space=vmem, size = 0x2000, scoped, tag = 'output window, operand 0, single buffered']
    %7 = vsyncpa [#allocation3], 0
    %8 = vsyncpa [#allocation6], 0
    %9 = vsyncpa [#allocation4], 0
    // Predicated region
    $region2: #{tpu_custom_call.1} parent=1 // pred_check
      _
    $region3: #{tpu_custom_call.1} parent=1 // pred_check_branch
      %11 = sbr.rel (0) target = $region5
    $region4: #{tpu_custom_call.1} parent=1 // pred_region
      %s13 = ssub.s32 256, 256
      %14 = vsyncadd [#allocation3], %s13
      %s16 = sshll.u32 [#allocation2], 4
      %s17 = int_to_ptr.vmem [resolvable:$true] %s16
      %19 = dma.hbm_to_vmem [thread:$0]  %s0, 256, %s17, [#allocation3]
    $region5: #{tpu_custom_call.1} parent=1 // pred_fallthru
      _
    // Predicated region
    $region6: #{tpu_custom_call.1} parent=1 // pred_check
      _
    $region7: #{tpu_custom_call.1} parent=1 // pred_check_branch
      %21 = sbr.rel (0) target = $region9
    $region8: #{tpu_custom_call.1} parent=1 // pred_region
      %s23 = ssub.s32 256, 256
      %24 = vsyncadd [#allocation6], %s23
      %s26 = sshll.u32 [#allocation5], 4
      %s27 = int_to_ptr.vmem [resolvable:$true] %s26
      %29 = dma.hbm_to_vmem [thread:$0]  %s1, 256, %s27, [#allocation6]
    $region9: #{tpu_custom_call.1} parent=1 // pred_fallthru
      _
    // Predicated region
    $region10: #{tpu_custom_call.1} parent=1 // pred_check
      _
    $region11: #{tpu_custom_call.1} parent=1 // pred_check_branch
      %31 = sbr.rel (0) target = $region13
    $region12: #{tpu_custom_call.1} parent=1 // pred_region
      %32 = dma.done [#allocation3], 256
    $region13: #{tpu_custom_call.1} parent=1 // pred_fallthru
      _
    // Predicated region
    $region14: #{tpu_custom_call.1} parent=1 // pred_check
      _
    $region15: #{tpu_custom_call.1} parent=1 // pred_check_branch
      %34 = sbr.rel (0) target = $region17
    $region16: #{tpu_custom_call.1} parent=1 // pred_region
      %35 = dma.done [#allocation6], 256
    $region17: #{tpu_custom_call.1} parent=1 // pred_fallthru
      _
    %v36 = vld [vmem:[#allocation2] sm:$0xff]
    %v37 = vld [vmem:[#allocation2 + $0x8] sm:$0xff]
    %v38 = vld [vmem:[#allocation5] sm:$0xff]
    %v39 = vld [vmem:[#allocation5 + $0x8] sm:$0xff]
    %v40 = vmul.f32 %v38, 0.1
    %v41 = vmul.f32 %v39, 0.1
    %v42 = vadd.f32 %v40, 1.0
    %v43 = vadd.f32 %v41, 1.0
    %v44 = vmul.f32 %v36, %v42
    %v45 = vmul.f32 %v37, %v43
    %46 = vst [vmem:[#allocation7] sm:$0xff] %v44
    %47 = vst [vmem:[#allocation7 + $0x8] sm:$0xff] %v45
    // Predicated region
    $region18: #{tpu_custom_call.1} parent=1 // pred_check
      _
    $region19: #{tpu_custom_call.1} parent=1 // pred_check_branch
      %49 = sbr.rel (0) target = $region21
    $region20: #{tpu_custom_call.1} parent=1 // pred_region
      %s51 = ssub.s32 256, 256
      %52 = vsyncadd [#allocation4], %s51
      %s54 = sshll.u32 [#allocation7], 4
      %s55 = int_to_ptr.vmem [resolvable:$true] %s54
      %57 = dma.vmem_to_hbm [thread:$0]  %s55, 256, %s2, [#allocation4]
    $region21: #{tpu_custom_call.1} parent=1 // pred_fallthru
      _
    // Predicated region
    $region22: #{tpu_custom_call.1} parent=1 // pred_check
      _
    $region23: #{tpu_custom_call.1} parent=1 // pred_check_branch
      %59 = sbr.rel (0) target = $region25
    $region24: #{tpu_custom_call.1} parent=1 // pred_region
      %60 = dma.done [#allocation4], 256
    $region25: #{tpu_custom_call.1} parent=1 // pred_fallthru
      _
    %61 = vsyncpa [#allocation3], 1
    %62 = vsyncpa [#allocation6], 1
    %63 = vsyncpa [#allocation4], 1

</llo_original>
